<compile_context>
chip_gen: v5e
topology: v5e:2x2
jax: 0.10.0
libtpu: 0.0.40
codegen_flags: <defaults>
</compile_context>

<pallas_src>
import jax
import jax.numpy as jnp
from jax.experimental import pallas as pl
from jax.experimental.pallas import tpu as pltpu

_LANE = 128      # f32 lane width
_SUBLANE = 8     # f32 sublane width
_TILE_B_MAX = 1024


def _round_up(n, m):
    return ((n + m - 1) // m) * m


def _cdiv(a, b):
    return (a + b - 1) // b


# ----------------------------- Pallas kernel ------------------------------

def _make_fused_fnn_kernel(n_hidden):
    """Fused forward.  Excitation is pre-folded into the weights, so:
         for each hidden layer: h = tanh(h @ Wt + b)
         y = h @ Wt_out + b_out ;  store only the real output columns."""

    def kernel(*refs):
        x_ref = refs[0]
        o_ref = refs[-1]
        h = x_ref[...]
        idx = 1
        for _ in range(n_hidden):
            w_ref, b_ref = refs[idx], refs[idx + 1]
            idx += 2
            h = jnp.tanh(
                jnp.dot(h, w_ref[...], preferred_element_type=jnp.float32)
                + b_ref[...])
        w_ref, b_ref = refs[idx], refs[idx + 1]
        y = jnp.dot(h, w_ref[...], preferred_element_type=jnp.float32) + b_ref[...]
        # Store only the real out_d columns (lane-masked store; the padded
        # compute columns never reach HBM).
        o_ref[...] = y[:, :o_ref.shape[1]].astype(o_ref.dtype)

    return kernel


# ------------------------- parameter preparation ---------------------------

def init_fnn_params(key, layers, in_d, out_d):
    """Deterministic synthetic init matching the module's parameter shapes
    (PyTorch layout: W (out, in), b (out,), excitation (1, out))."""
    params = {"hidden": [], "out": None}
    prev = in_d
    for layer in layers:
        key, kw, kb, ke = jax.random.split(key, 4)
        bound = jnp.sqrt(6.0 / prev)                       # 'He uniform'
        W = jax.random.uniform(kw, (layer, prev), jnp.float32, -bound, bound)
        b = jax.random.uniform(kb, (layer,), jnp.float32, 0.0, 1.0)
        std = jnp.sqrt(2.0 / (1 + layer))
        e = std * jax.random.normal(ke, (1, layer), jnp.float32)
        params["hidden"].append((W, b, e))
        prev = layer
    key, kw, kb = jax.random.split(key, 3)
    bound = jnp.sqrt(6.0 / prev)
    W_out = jax.random.uniform(kw, (out_d, prev), jnp.float32, -bound, bound)
    b_out = jax.random.uniform(kb, (out_d,), jnp.float32, 0.0, 1.0)
    params["out"] = (W_out, b_out)
    return params


def prepare_pallas_params(params, in_d):
    """Pre-transpose + zero-pad all parameters ONCE (not per forward call),
    and fold each layer's excitation into the NEXT layer's weights:

        (e_i ⊙ tanh(h_i)) @ W_{i+1}^T  ==  tanh(h_i) @ (diag(e_i) · W_{i+1}^T)

    Weight i becomes (prev_pad, out_pad) with the real block top-left; bias
    becomes (1, out_pad).  Zero padding keeps padded lanes identically zero
    through tanh, so the padded network equals the unpadded one in real lanes.
    """
    flat = []
    prev_pad = in_d                      # x is fed with its real feature width
    e_prev = None                        # excitation of previous layer's output
    for (W, b, e) in params["hidden"]:
        out_w, in_w = W.shape
        out_pad = _round_up(out_w, _LANE)
        Wt_real = W.T                    # (in_w, out_w)
        if e_prev is not None:
            Wt_real = e_prev.reshape(-1, 1) * Wt_real     # diag(e_prev) @ W.T
        Wt = jnp.zeros((prev_pad, out_pad), jnp.float32).at[:in_w, :out_w].set(Wt_real)
        bp = jnp.zeros((1, out_pad), jnp.float32).at[0, :out_w].set(b)
        flat.extend([Wt, bp])
        prev_pad = out_pad
        e_prev = e[0]                    # (out_w,)
    W_out, b_out = params["out"]
    out_d, in_w = W_out.shape
    out_pad = _round_up(out_d, _LANE)
    Wt_real = W_out.T
    if e_prev is not None:
        Wt_real = e_prev.reshape(-1, 1) * Wt_real
    Wt = jnp.zeros((prev_pad, out_pad), jnp.float32).at[:in_w, :out_d].set(Wt_real)
    bp = jnp.zeros((1, out_pad), jnp.float32).at[0, :out_d].set(b_out)
    flat.extend([Wt, bp])
    return {
        "flat": tuple(flat),
        "n_hidden": len(params["hidden"]),
        "in_d": in_d,
        "out_d": out_d,
    }


# ----------------------------- FNN (forward) -------------------------------

def _choose_batch_tiling(B, tile_b_max):
    """Pick (tile_b, B_pad) minimizing padding; single tile when it fits.
    For very large B this naturally gives >=2 grid steps (feeds both v7x TCs)."""
    B8 = _round_up(B, _SUBLANE)
    if B8 <= tile_b_max:
        return B8, B8
    n_tiles = _cdiv(B, tile_b_max)
    tile_b = _round_up(_cdiv(B, n_tiles), _SUBLANE)
    return tile_b, tile_b * n_tiles


def fnn_forward_pallas(pparams, x, tile_b_max=_TILE_B_MAX):
    """Single fused pallas_call over a batch grid."""
    # TODO(synk): `transforms` path uses surkit's `transform(t, x)` (source not
    # provided); transforms=None here so no input concat is performed.
    B, in_d = x.shape
    assert in_d == pparams["in_d"]

    tile_b, B_pad = _choose_batch_tiling(B, tile_b_max)
    if B_pad != B:
        x = jnp.pad(x, ((0, B_pad - B), (0, 0)))

    flat = pparams["flat"]
    n_hidden = pparams["n_hidden"]
    out_d = pparams["out_d"]

    # x / output tiled over batch; all (padded) params are full resident blocks.
    in_specs = [pl.BlockSpec((tile_b, in_d), lambda i: (i, 0))]
    for a in flat:
        in_specs.append(pl.BlockSpec(a.shape, lambda i: (0, 0)))
    # Output is stored at its REAL width (out_d): ~64x less HBM writeback than
    # a 128-lane padded f32 output, and no post-kernel feature slice.
    out_specs = pl.BlockSpec((tile_b, out_d), lambda i: (i, 0))

    out = pl.pallas_call(
        _make_fused_fnn_kernel(n_hidden),
        out_shape=jax.ShapeDtypeStruct((B_pad, out_d), jnp.float32),
        grid_spec=pltpu.PrefetchScalarGridSpec(
            num_scalar_prefetch=0,
            grid=(B_pad // tile_b,),
            in_specs=in_specs,
            out_specs=out_specs,
        ),
        compiler_params=pltpu.CompilerParams(
            dimension_semantics=("parallel",)),   # v7x: 2 TCs split the batch
    )(x, *flat)

    return out if B_pad == B else out[:B]


def fnn_forward_ref(params, x):
    """Pure-JAX reference (unpadded, original PyTorch-layout params, explicit
    excitation — verifies the weight-folding is algebraically identical)."""
    for (W, b, e) in params["hidden"]:
        x = jnp.tanh(x @ W.T + b)
        x = e * x
    W_out, b_out = params["out"]
    return x @ W_out.T + b_out


# --------------------------------- main ------------------------------------

if __name__ == "__main__":
    layers = [32, 32]
    in_d, out_d = 4, 2

    key = jax.random.PRNGKey(0)
    key, kx1, kx2 = jax.random.split(key, 3)

    params = init_fnn_params(key, layers, in_d, out_d)
    pparams = prepare_pallas_params(params, in_d)

    # Small batch (single tile, batch 8, already sublane-aligned).
    x_small = jax.random.normal(kx1, (8, in_d), jnp.float32)
    out_small = jax.block_until_ready(fnn_forward_pallas(pparams, x_small))
    ref_small = fnn_forward_ref(params, x_small)
    assert out_small.shape == (8, out_d), out_small.shape
    assert jnp.allclose(out_small, ref_small, atol=1e-5, rtol=1e-5)

    # Non-aligned batch: single right-sized tile (300 -> 304, not 512).
    x_big = jax.random.normal(kx2, (300, in_d), jnp.float32)
    out_big = jax.block_until_ready(fnn_forward_pallas(pparams, x_big))
    ref_big = fnn_forward_ref(params, x_big)
    assert out_big.shape == (300, out_d), out_big.shape
    assert jnp.allclose(out_big, ref_big, atol=1e-5, rtol=1e-5)

    # Same input with a small tile cap to exercise the multi-tile grid path.
    out_tiled = jax.block_until_ready(
        fnn_forward_pallas(pparams, x_big, tile_b_max=128))
    assert out_tiled.shape == (300, out_d), out_tiled.shape
    assert jnp.allclose(out_tiled, ref_big, atol=1e-5, rtol=1e-5)

    print("KERNEL_OK")
</pallas_src>

<mosaic_0001>
module attributes {stable_mosaic.version = 11 : i64} {
  func.func @kernel(%arg0: i32, %arg1: memref<8x4xf32, #tpu.memory_space<vmem>>, %arg2: memref<4x128xf32, #tpu.memory_space<vmem>>, %arg3: memref<1x128xf32, #tpu.memory_space<vmem>>, %arg4: memref<128x128xf32, #tpu.memory_space<vmem>>, %arg5: memref<1x128xf32, #tpu.memory_space<vmem>>, %arg6: memref<128x128xf32, #tpu.memory_space<vmem>>, %arg7: memref<1x128xf32, #tpu.memory_space<vmem>>, %arg8: memref<8x2xf32, #tpu.memory_space<vmem>>) attributes {dimension_semantics = [#tpu.dimension_semantics<parallel>], iteration_bounds = array<i64: 1>, scalar_prefetch = 0 : i64, scratch_operands = 0 : i64, tpu.core_type = #tpu.core_type<tc>, window_params = [{transform_indices = @transform_0, window_bounds = array<i64: 8, 4>}, {pipeline_mode = #tpu.pipeline_mode<synchronous>, transform_indices = @transform_1, window_bounds = array<i64: 4, 128>}, {pipeline_mode = #tpu.pipeline_mode<synchronous>, transform_indices = @transform_2, window_bounds = array<i64: 1, 128>}, {pipeline_mode = #tpu.pipeline_mode<synchronous>, transform_indices = @transform_3, window_bounds = array<i64: 128, 128>}, {pipeline_mode = #tpu.pipeline_mode<synchronous>, transform_indices = @transform_4, window_bounds = array<i64: 1, 128>}, {pipeline_mode = #tpu.pipeline_mode<synchronous>, transform_indices = @transform_5, window_bounds = array<i64: 128, 128>}, {pipeline_mode = #tpu.pipeline_mode<synchronous>, transform_indices = @transform_6, window_bounds = array<i64: 1, 128>}, {transform_indices = @transform_7, window_bounds = array<i64: 8, 2>}]} {
    %c0 = arith.constant 0 : index
    %c0_0 = arith.constant 0 : index
    %0 = vector.load %arg1[%c0, %c0_0] : memref<8x4xf32, #tpu.memory_space<vmem>>, vector<8x4xf32>
    %c0_1 = arith.constant 0 : index
    %c0_2 = arith.constant 0 : index
    %1 = vector.load %arg2[%c0_1, %c0_2] : memref<4x128xf32, #tpu.memory_space<vmem>>, vector<4x128xf32>
    %cst = arith.constant dense<0.000000e+00> : vector<8x128xf32>
    %2 = tpu.matmul %0, %1, %cst {dimension_numbers = #tpu.dot_dimension_numbers<[1], [0], [0], [1], [0, 0, 1, 1], [], []>} : vector<8x4xf32>, vector<4x128xf32>, vector<8x128xf32> -> vector<8x128xf32>
    %c0_3 = arith.constant 0 : index
    %c0_4 = arith.constant 0 : index
    %3 = vector.load %arg3[%c0_3, %c0_4] : memref<1x128xf32, #tpu.memory_space<vmem>>, vector<1x128xf32>
    %4 = vector.broadcast %3 : vector<1x128xf32> to vector<8x128xf32>
    %5 = arith.addf %2, %4 : vector<8x128xf32>
    %6 = math.tanh %5 : vector<8x128xf32>
    %c0_5 = arith.constant 0 : index
    %c0_6 = arith.constant 0 : index
    %7 = vector.load %arg4[%c0_5, %c0_6] : memref<128x128xf32, #tpu.memory_space<vmem>>, vector<128x128xf32>
    %cst_7 = arith.constant dense<0.000000e+00> : vector<8x128xf32>
    %8 = tpu.matmul %6, %7, %cst_7 {dimension_numbers = #tpu.dot_dimension_numbers<[1], [0], [0], [1], [0, 0, 1, 1], [], []>} : vector<8x128xf32>, vector<128x128xf32>, vector<8x128xf32> -> vector<8x128xf32>
    %c0_8 = arith.constant 0 : index
    %c0_9 = arith.constant 0 : index
    %9 = vector.load %arg5[%c0_8, %c0_9] : memref<1x128xf32, #tpu.memory_space<vmem>>, vector<1x128xf32>
    %10 = vector.broadcast %9 : vector<1x128xf32> to vector<8x128xf32>
    %11 = arith.addf %8, %10 : vector<8x128xf32>
    %12 = math.tanh %11 : vector<8x128xf32>
    %c0_10 = arith.constant 0 : index
    %c0_11 = arith.constant 0 : index
    %13 = vector.load %arg6[%c0_10, %c0_11] : memref<128x128xf32, #tpu.memory_space<vmem>>, vector<128x128xf32>
    %cst_12 = arith.constant dense<0.000000e+00> : vector<8x128xf32>
    %14 = tpu.matmul %12, %13, %cst_12 {dimension_numbers = #tpu.dot_dimension_numbers<[1], [0], [0], [1], [0, 0, 1, 1], [], []>} : vector<8x128xf32>, vector<128x128xf32>, vector<8x128xf32> -> vector<8x128xf32>
    %c0_13 = arith.constant 0 : index
    %c0_14 = arith.constant 0 : index
    %15 = vector.load %arg7[%c0_13, %c0_14] : memref<1x128xf32, #tpu.memory_space<vmem>>, vector<1x128xf32>
    %16 = vector.broadcast %15 : vector<1x128xf32> to vector<8x128xf32>
    %17 = arith.addf %14, %16 : vector<8x128xf32>
    %18 = vector.extract_strided_slice %17 {offsets = [0, 0], sizes = [8, 2], strides = [1, 1]} : vector<8x128xf32> to vector<8x2xf32>
    %c0_15 = arith.constant 0 : index
    %c0_16 = arith.constant 0 : index
    %19 = vector.load %arg8[%c0_15, %c0_16] : memref<8x2xf32, #tpu.memory_space<vmem>>, vector<8x2xf32>
    tpu.vector_store %arg8[%c0_15, %c0_16], %18 {strides = array<i32>} : memref<8x2xf32, #tpu.memory_space<vmem>>, vector<8x2xf32>,
    return
  }
  func.func @transform_0(%arg0: i32) -> (i32, i32) {
    %c0_i32 = arith.constant 0 : i32
    %c0_i32_0 = arith.constant 0 : i32
    return %arg0, %c0_i32 : i32, i32
  }
  func.func @transform_1(%arg0: i32) -> (i32, i32) {
    %c0_i32 = arith.constant 0 : i32
    %c0_i32_0 = arith.constant 0 : i32
    %c0_i32_1 = arith.constant 0 : i32
    return %c0_i32, %c0_i32_0 : i32, i32
  }
  func.func @transform_2(%arg0: i32) -> (i32, i32) {
    %c0_i32 = arith.constant 0 : i32
    %c0_i32_0 = arith.constant 0 : i32
    %c0_i32_1 = arith.constant 0 : i32
    return %c0_i32, %c0_i32_0 : i32, i32
  }
  func.func @transform_3(%arg0: i32) -> (i32, i32) {
    %c0_i32 = arith.constant 0 : i32
    %c0_i32_0 = arith.constant 0 : i32
    %c0_i32_1 = arith.constant 0 : i32
    return %c0_i32, %c0_i32_0 : i32, i32
  }
  func.func @transform_4(%arg0: i32) -> (i32, i32) {
    %c0_i32 = arith.constant 0 : i32
    %c0_i32_0 = arith.constant 0 : i32
    %c0_i32_1 = arith.constant 0 : i32
    return %c0_i32, %c0_i32_0 : i32, i32
  }
  func.func @transform_5(%arg0: i32) -> (i32, i32) {
    %c0_i32 = arith.constant 0 : i32
    %c0_i32_0 = arith.constant 0 : i32
    %c0_i32_1 = arith.constant 0 : i32
    return %c0_i32, %c0_i32_0 : i32, i32
  }
  func.func @transform_6(%arg0: i32) -> (i32, i32) {
    %c0_i32 = arith.constant 0 : i32
    %c0_i32_0 = arith.constant 0 : i32
    %c0_i32_1 = arith.constant 0 : i32
    return %c0_i32, %c0_i32_0 : i32, i32
  }
  func.func @transform_7(%arg0: i32) -> (i32, i32) {
    %c0_i32 = arith.constant 0 : i32
    %c0_i32_0 = arith.constant 0 : i32
    return %arg0, %c0_i32 : i32, i32
  }
}

</mosaic_0001>

<llo_original>
// kernel: tpu_custom_call.1
$region0: #{tpu_custom_call.1}
  #allocation0 [shape = 'u32[]', space=smem, size = 0x4, offset = 0x4, fixed_abs, tag = 'smem constant byte address 0x4 - core index']
  #allocation1 [shape = 'u32[72,128]{1,0:T(1,128)}', space=vmem, size = 0x9000, scoped, tag = 'internal scratch']
  %s0 = inlined_call_operand.vmem [shape: f32[8,4], index: 0, kind: input, shape index: {}]
  %s1 = inlined_call_operand.vmem [shape: f32[4,128], index: 1, kind: input, shape index: {}]
  %s2 = inlined_call_operand.vmem [shape: f32[1,128], index: 2, kind: input, shape index: {}]
  %s3 = inlined_call_operand.hbm [shape: f32[128,128], index: 3, kind: input, shape index: {}]
  %s4 = inlined_call_operand.vmem [shape: f32[1,128], index: 4, kind: input, shape index: {}]
  %s5 = inlined_call_operand.hbm [shape: f32[128,128], index: 5, kind: input, shape index: {}]
  %s6 = inlined_call_operand.vmem [shape: f32[1,128], index: 6, kind: input, shape index: {}]
  %s7 = inlined_call_operand.vmem [shape: f32[8,2], index: 7, kind: output, shape index: {}]
  %s8 = sld [smem:[#allocation0]]
  $region46: #{tpu_custom_call.1} parent=0
    _
  %s10 = ssub.s32 1, %s8
  %s11 = scalar_select 0, %s10, %s8
  $region1: #{tpu_custom_call.1} parent=0
    #allocation2 [shape = 'u8[65536]{0}', space=vmem, size = 0x10000, scoped, tag = 'input window, operand 3, single buffered']
    #allocation3 [shape = 's32[1]{0}', space=sflag, size = 0x4, scoped, tag = 'scoped memory for tpu_custom_call.1']
    #allocation4 [shape = 'u8[65536]{0}', space=vmem, size = 0x10000, scoped, tag = 'input window, operand 5, single buffered']
    #allocation5 [shape = 's32[1]{0}', space=sflag, size = 0x4, scoped, tag = 'scoped memory for tpu_custom_call.1']
    %12 = vsyncpa [#allocation3], 0
    %13 = vsyncpa [#allocation5], 0
    // Predicated region
    $region2: #{tpu_custom_call.1} parent=1 // pred_check
      _
    $region3: #{tpu_custom_call.1} parent=1 // pred_check_branch
      %15 = sbr.rel (0) target = $region5
    $region4: #{tpu_custom_call.1} parent=1 // pred_region
      _
    $region5: #{tpu_custom_call.1} parent=1 // pred_fallthru
      _
    // Predicated region
    $region6: #{tpu_custom_call.1} parent=1 // pred_check
      _
    $region7: #{tpu_custom_call.1} parent=1 // pred_check_branch
      %17 = sbr.rel (0) target = $region9
    $region8: #{tpu_custom_call.1} parent=1 // pred_region
      _
    $region9: #{tpu_custom_call.1} parent=1 // pred_fallthru
      _
    // Predicated region
    $region10: #{tpu_custom_call.1} parent=1 // pred_check
      _
    $region11: #{tpu_custom_call.1} parent=1 // pred_check_branch
      %19 = sbr.rel (0) target = $region13
    $region12: #{tpu_custom_call.1} parent=1 // pred_region
      _
    $region13: #{tpu_custom_call.1} parent=1 // pred_fallthru
      _
    // Predicated region
    $region14: #{tpu_custom_call.1} parent=1 // pred_check
      _
    $region15: #{tpu_custom_call.1} parent=1 // pred_check_branch
      %21 = sbr.rel (0) target = $region17
    $region16: #{tpu_custom_call.1} parent=1 // pred_region
      %23 = vsyncadd [#allocation3], 0
      %s24 = sshll.u32 %s3, 4
      %s25 = int_to_ptr.hbm [resolvable:$true] %s24
      %s26 = sshll.u32 [#allocation2], 4
      %s27 = int_to_ptr.vmem [resolvable:$true] %s26
      %32 = dma.hbm_to_vmem [thread:$0]  %s25, 2048, %s27, [#allocation3], 128, 128, 8
    $region17: #{tpu_custom_call.1} parent=1 // pred_fallthru
      _
    // Predicated region
    $region18: #{tpu_custom_call.1} parent=1 // pred_check
      _
    $region19: #{tpu_custom_call.1} parent=1 // pred_check_branch
      %34 = sbr.rel (0) target = $region21
    $region20: #{tpu_custom_call.1} parent=1 // pred_region
      _
    $region21: #{tpu_custom_call.1} parent=1 // pred_fallthru
      _
    // Predicated region
    $region22: #{tpu_custom_call.1} parent=1 // pred_check
      _
    $region23: #{tpu_custom_call.1} parent=1 // pred_check_branch
      %36 = sbr.rel (0) target = $region25
    $region24: #{tpu_custom_call.1} parent=1 // pred_region
      %38 = vsyncadd [#allocation5], 0
      %s39 = sshll.u32 %s5, 4
      %s40 = int_to_ptr.hbm [resolvable:$true] %s39
      %s41 = sshll.u32 [#allocation4], 4
      %s42 = int_to_ptr.vmem [resolvable:$true] %s41
      %47 = dma.hbm_to_vmem [thread:$0]  %s40, 2048, %s42, [#allocation5], 128, 128, 8
    $region25: #{tpu_custom_call.1} parent=1 // pred_fallthru
      _
    // Predicated region
    $region26: #{tpu_custom_call.1} parent=1 // pred_check
      _
    $region27: #{tpu_custom_call.1} parent=1 // pred_check_branch
      %49 = sbr.rel (0) target = $region29
    $region28: #{tpu_custom_call.1} parent=1 // pred_region
      _
    $region29: #{tpu_custom_call.1} parent=1 // pred_fallthru
      _
    // Predicated region
    $region30: #{tpu_custom_call.1} parent=1 // pred_check
      _
    $region31: #{tpu_custom_call.1} parent=1 // pred_check_branch
      %51 = sbr.rel (0) target = $region33
    $region32: #{tpu_custom_call.1} parent=1 // pred_region
      %53 = dma.done [#allocation3], 2048
    $region33: #{tpu_custom_call.1} parent=1 // pred_fallthru
      _
    // Predicated region
    $region34: #{tpu_custom_call.1} parent=1 // pred_check
      _
    $region35: #{tpu_custom_call.1} parent=1 // pred_check_branch
      %55 = sbr.rel (0) target = $region37
    $region36: #{tpu_custom_call.1} parent=1 // pred_region
      %57 = dma.done [#allocation5], 2048
    $region37: #{tpu_custom_call.1} parent=1 // pred_fallthru
      _
    %v58 = vld [vmem:[%s0] sm:$0xff]
    %v59 = vld [vmem:[%s1] sm:$0xf]
    %v60 = vld [vmem:[%s2] sm:$0x1]
    %v62 = vperm.slane %v60, 0
    %vm64 = vcmask 31744
    %v66 = vsel %vm64, %v58, 0
    %vm68 = vcmask 1043456
    %v70 = vsel %vm68, %v59, 0
    %72 = vmatpush.msra.mxu0 0.0
    %73 = vmatpush.msra.mxu0 0.0
    %74 = vmatpush.msra.mxu0 0.0
    %75 = vmatpush.msra.mxu0 0.0
    %76 = vmatpush.msra.mxu0 0.0
    %77 = vmatpush.msra.mxu0 0.0
    %78 = vmatpush.msra.mxu0 0.0
    %79 = vmatpush.msra.mxu0 0.0
    %80 = vmatpush.msra.mxu0 0.0
    %81 = vmatpush.msra.mxu0 0.0
    %82 = vmatpush.msra.mxu0 0.0
    %83 = vmatpush.msra.mxu0 0.0
    %84 = vmatpush.msra.mxu0 0.0
    %85 = vmatpush.msra.mxu0 0.0
    %86 = vmatpush.msra.mxu0 0.0
    %87 = vmatpush.msra.mxu0 %v70
    %88 = vmatmul.f32.gmra.mxu0 %v66
    %v89 = vpop.f32.mrf.mxu0
    %v90 = vadd.f32 %v62, %v89
    %91 = vdwg.mxu0
    %v92 = vtanh.pop %v90
    %v93 = vld [vmem:[#allocation2] sm:$0xff]
    %v94 = vld [vmem:[#allocation2 + $0x8] sm:$0xff]
    %v95 = vld [vmem:[#allocation2 + $0x10] sm:$0xff]
    %v96 = vld [vmem:[#allocation2 + $0x18] sm:$0xff]
    %v97 = vld [vmem:[#allocation2 + $0x20] sm:$0xff]
    %v98 = vld [vmem:[#allocation2 + $0x28] sm:$0xff]
    %v99 = vld [vmem:[#allocation2 + $0x30] sm:$0xff]
    %v100 = vld [vmem:[#allocation2 + $0x38] sm:$0xff]
    %v101 = vld [vmem:[#allocation2 + $0x40] sm:$0xff]
    %v102 = vld [vmem:[#allocation2 + $0x48] sm:$0xff]
    %v103 = vld [vmem:[#allocation2 + $0x50] sm:$0xff]
    %v104 = vld [vmem:[#allocation2 + $0x58] sm:$0xff]
    %v105 = vld [vmem:[#allocation2 + $0x60] sm:$0xff]
    %v106 = vld [vmem:[#allocation2 + $0x68] sm:$0xff]
    %v107 = vld [vmem:[#allocation2 + $0x70] sm:$0xff]
    %v108 = vld [vmem:[#allocation2 + $0x78] sm:$0xff]
    %v109 = vld [vmem:[%s4] sm:$0x1]
    %v111 = vperm.slane %v109, 0
    %113 = vmatpush.msra.mxu0 %v108
    %114 = vmatpush.msra.mxu0 %v107
    %115 = vmatpush.msra.mxu0 %v106
    %116 = vmatpush.msra.mxu0 %v105
    %117 = vmatpush.msra.mxu0 %v104
    %118 = vmatpush.msra.mxu0 %v103
    %119 = vmatpush.msra.mxu0 %v102
    %120 = vmatpush.msra.mxu0 %v101
    %121 = vmatpush.msra.mxu0 %v100
    %122 = vmatpush.msra.mxu0 %v99
    %123 = vmatpush.msra.mxu0 %v98
    %124 = vmatpush.msra.mxu0 %v97
    %125 = vmatpush.msra.mxu0 %v96
    %126 = vmatpush.msra.mxu0 %v95
    %127 = vmatpush.msra.mxu0 %v94
    %128 = vmatpush.msra.mxu0 %v93
    %129 = vmatmul.f32.gmra.mxu0 %v92
    %v130 = vpop.f32.mrf.mxu0
    %v131 = vadd.f32 %v111, %v130
    %132 = vdwg.mxu0
    %v133 = vtanh.pop %v131
    %v134 = vld [vmem:[#allocation4] sm:$0xff]
    %v135 = vld [vmem:[#allocation4 + $0x8] sm:$0xff]
    %v136 = vld [vmem:[#allocation4 + $0x10] sm:$0xff]
    %v137 = vld [vmem:[#allocation4 + $0x18] sm:$0xff]
    %v138 = vld [vmem:[#allocation4 + $0x20] sm:$0xff]
    %v139 = vld [vmem:[#allocation4 + $0x28] sm:$0xff]
    %v140 = vld [vmem:[#allocation4 + $0x30] sm:$0xff]
    %v141 = vld [vmem:[#allocation4 + $0x38] sm:$0xff]
    %v142 = vld [vmem:[#allocation4 + $0x40] sm:$0xff]
    %v143 = vld [vmem:[#allocation4 + $0x48] sm:$0xff]
    %v144 = vld [vmem:[#allocation4 + $0x50] sm:$0xff]
    %v145 = vld [vmem:[#allocation4 + $0x58] sm:$0xff]
    %v146 = vld [vmem:[#allocation4 + $0x60] sm:$0xff]
    %v147 = vld [vmem:[#allocation4 + $0x68] sm:$0xff]
    %v148 = vld [vmem:[#allocation4 + $0x70] sm:$0xff]
    %v149 = vld [vmem:[#allocation4 + $0x78] sm:$0xff]
    %v150 = vld [vmem:[%s6] sm:$0x1]
    %v152 = vperm.slane %v150, 0
    %154 = vmatpush.msra.mxu0 %v149
    %155 = vmatpush.msra.mxu0 %v148
    %156 = vmatpush.msra.mxu0 %v147
    %157 = vmatpush.msra.mxu0 %v146
    %158 = vmatpush.msra.mxu0 %v145
    %159 = vmatpush.msra.mxu0 %v144
    %160 = vmatpush.msra.mxu0 %v143
    %161 = vmatpush.msra.mxu0 %v142
    %162 = vmatpush.msra.mxu0 %v141
    %163 = vmatpush.msra.mxu0 %v140
    %164 = vmatpush.msra.mxu0 %v139
    %165 = vmatpush.msra.mxu0 %v138
    %166 = vmatpush.msra.mxu0 %v137
    %167 = vmatpush.msra.mxu0 %v136
    %168 = vmatpush.msra.mxu0 %v135
    %169 = vmatpush.msra.mxu0 %v134
    %170 = vmatmul.f32.gmra.mxu0 %v133
    %v171 = vpop.f32.mrf.mxu0
    %v172 = vadd.f32 %v152, %v171
    %173 = vdwg.mxu0
    %vm174 = vcmask 15360
    %175 = vst.msk [vmem:[%s7] sm:$0xff] %vm174, %v172
    // Predicated region
    $region38: #{tpu_custom_call.1} parent=1 // pred_check
      _
    $region39: #{tpu_custom_call.1} parent=1 // pred_check_branch
      %177 = sbr.rel (0) target = $region41
    $region40: #{tpu_custom_call.1} parent=1 // pred_region
      _
    $region41: #{tpu_custom_call.1} parent=1 // pred_fallthru
      _
    // Predicated region
    $region42: #{tpu_custom_call.1} parent=1 // pred_check
      _
    $region43: #{tpu_custom_call.1} parent=1 // pred_check_branch
      %179 = sbr.rel (0) target = $region45
    $region44: #{tpu_custom_call.1} parent=1 // pred_region
      _
    $region45: #{tpu_custom_call.1} parent=1 // pred_fallthru
      _
    %180 = vsyncpa [#allocation3], 1
    %181 = vsyncpa [#allocation5], 1

</llo_original>
